<compile_context>
chip_gen: v6e
topology: v6e:2x2x1
jax: 0.10.0
libtpu: 0.0.40
codegen_flags: <defaults>
</compile_context>

<pallas_src>
import functools

import jax
import jax.numpy as jnp
from jax.experimental import pallas as pl
from jax.experimental.pallas import tpu as pltpu

LANE = 128
SUBLANE = 8


def _is_v7x() -> bool:
    try:
        kind = jax.devices()[0].device_kind.lower()
    except Exception:
        return False
    return "v7" in kind


def _wl1_kernel(x_ref, y_ref, o_ref, acc_ref, *, rows, need_mask):
    """Accumulate sum(|x - y| * (x + y)) into an (8, LANE) vector accumulator."""
    c = pl.program_id(0)            # partial-sum / core index ("parallel")
    i = pl.program_id(1)            # reduction step ("arbitrary")
    n_i = pl.num_programs(1)

    @pl.when(i == 0)
    def _():
        acc_ref[...] = jnp.zeros_like(acc_ref)

    x = x_ref[...].astype(jnp.float32)
    y = y_ref[...].astype(jnp.float32)
    w = jnp.abs(x - y) * (x + y)
    tile_rows = w.shape[0]

    def _accumulate(v):
        # (tile_rows, LANE) -> (tile_rows//8, 8, LANE) -> sum over leading axis:
        # pure vreg (VALU) adds, no cross-sublane XLU reduce in the hot loop.
        acc_ref[...] += jnp.sum(v.reshape(-1, SUBLANE, LANE), axis=0)

    if need_mask:
        # Logical (unclamped) block index.  Duplicate blocks (from the clamped
        # index_map when blocks don't split evenly) land at row_start >= rows
        # and are zeroed entirely by the mask path.
        blk = c * n_i + i
        row_start = blk * tile_rows

        @pl.when(row_start + tile_rows <= rows)
        def _():
            _accumulate(w)                      # full interior tile: no mask

        @pl.when(row_start + tile_rows > rows)
        def _():
            row_ids = row_start + jax.lax.broadcasted_iota(jnp.int32, w.shape, 0)
            _accumulate(jnp.where(row_ids < rows, w, 0.0))
    else:
        _accumulate(w)

    @pl.when(i == n_i - 1)
    def _():
        o_ref[...] = acc_ref[...]


def _wl1_sum_jnp(x, y):
    x = x.astype(jnp.float32)
    y = y.astype(jnp.float32)
    return jnp.sum(jnp.abs(x - y) * (x + y))


def _wl1_sum_pallas(x2, y2):
    rows = x2.shape[0]
    itemsize = x2.dtype.itemsize
    v7x = _is_v7x()

    # ~4 MiB per input block (~8 MiB on v7x), independent of dtype width, so
    # the ~0.35 us per-grid-step overhead stays a small fraction of step time.
    tile_bytes = (8 if v7x else 4) * 1024 * 1024
    tile_rows_max = max(SUBLANE, tile_bytes // (LANE * itemsize))
    tile_rows = min((rows // SUBLANE) * SUBLANE, tile_rows_max)

    blocks_total = pl.cdiv(rows, tile_rows)
    # A second partial sum only where a second TensorCore exists and there is
    # enough work to split; on 1-TC chips (or tiny grids) it is pure waste.
    num_partials = 2 if (v7x and blocks_total >= 4) else 1
    blocks_per_core = pl.cdiv(blocks_total, num_partials)
    need_mask = (rows % tile_rows != 0) or (num_partials * blocks_per_core != blocks_total)

    def in_map(c, i):
        # Clamp so the generated DMA never starts past the array; the kernel
        # zeroes the duplicate via the unclamped logical block index.
        return (jnp.minimum(c * blocks_per_core + i, blocks_total - 1), 0)

    out_rows = num_partials * SUBLANE
    cost = pl.CostEstimate(
        flops=5 * rows * LANE,
        transcendentals=0,
        bytes_accessed=2 * rows * LANE * itemsize + out_rows * LANE * 4,
    )

    partials = pl.pallas_call(
        functools.partial(_wl1_kernel, rows=rows, need_mask=need_mask),
        out_shape=jax.ShapeDtypeStruct((out_rows, LANE), jnp.float32),
        grid_spec=pltpu.PrefetchScalarGridSpec(
            num_scalar_prefetch=0,
            grid=(num_partials, blocks_per_core),
            in_specs=[
                pl.BlockSpec((tile_rows, LANE), in_map),
                pl.BlockSpec((tile_rows, LANE), in_map),
            ],
            out_specs=pl.BlockSpec((SUBLANE, LANE), lambda c, i: (c, 0)),
            scratch_shapes=[pltpu.VMEM((SUBLANE, LANE), jnp.float32)],
        ),
        compiler_params=pltpu.CompilerParams(
            # TODO(synk): if xprof on v7x shows one TensorCore idle, switch the
            # leading axis to pltpu.CORE_PARALLEL (only core_parallel reliably
            # changes core assignment per measured data).
            dimension_semantics=("parallel", "arbitrary"),
            vmem_limit_bytes=(48 if v7x else 64) * 1024 * 1024,
        ),
        cost_estimate=cost,
    )(x2, y2)

    # Single cross-sublane + cross-lane reduce, done once outside the kernel.
    return jnp.sum(partials)


def weighted_l1_loss(inputs: jax.Array, targets: jax.Array) -> jax.Array:
    """Pallas TPU implementation of WeightedL1Loss.forward."""
    assert inputs.shape == targets.shape

    x = inputs.reshape(-1)
    y = targets.reshape(-1)
    n = x.shape[0]
    rows = n // LANE

    if rows < SUBLANE:
        # TODO(synk): tiny inputs (< 1024 elements) have no full (8, 128) tile;
        # a Pallas launch is pure overhead, so they stay in plain jnp.
        return _wl1_sum_jnp(x, y) / jnp.float32(n)

    n_main = rows * LANE
    if n_main == n:
        # Common case (NCHW maps): free reshape, no copy, no tail.
        x2 = x.reshape(rows, LANE)
        y2 = y.reshape(rows, LANE)
        tail = jnp.float32(0.0)
    else:
        # Rare non-lane-multiple path: the kernel handles the lane-aligned
        # prefix; the < 128-element tail is folded in wrapper-side (no
        # full-array pad / duplicate HBM traffic).
        x2 = x[:n_main].reshape(rows, LANE)
        y2 = y[:n_main].reshape(rows, LANE)
        tail = _wl1_sum_jnp(x[n_main:], y[n_main:])

    return (_wl1_sum_pallas(x2, y2) + tail) / jnp.float32(n)


def _reference(inputs, targets):
    x = inputs.reshape(-1).astype(jnp.float32)
    y = targets.reshape(-1).astype(jnp.float32)
    return jnp.mean(jnp.abs(x - y) * (x + y))


if __name__ == "__main__":
    key = jax.random.PRNGKey(0)
    k1, k2, k3, k4, k5, k6 = jax.random.split(key, 6)

    # Primary: NCHW-like, lane-multiple element count (copy-free, unmasked path).
    shape = (2, 4, 16, 16)
    a = jax.random.uniform(k1, shape, dtype=jnp.float32)
    b = jax.random.uniform(k2, shape, dtype=jnp.float32)
    loss = weighted_l1_loss(a, b)
    jax.block_until_ready(loss)
    ref = _reference(a, b)
    assert jnp.allclose(loss, ref, rtol=1e-5, atol=1e-6), (loss, ref)

    # Secondary: non-lane-multiple count -> partial last block + wrapper tail.
    shape2 = (3, 5, 7, 11)   # 1155 elements: 9 kernel rows + 3-element tail
    a2 = jax.random.uniform(k3, shape2, dtype=jnp.float32)
    b2 = jax.random.uniform(k4, shape2, dtype=jnp.float32)
    loss2 = weighted_l1_loss(a2, b2)
    jax.block_until_ready(loss2)
    ref2 = _reference(a2, b2)
    assert jnp.allclose(loss2, ref2, rtol=1e-5, atol=1e-6), (loss2, ref2)

    # Tertiary: bf16 inputs exercise the in-kernel upcast (halved HBM) path.
    a3 = jax.random.uniform(k5, shape, dtype=jnp.float32).astype(jnp.bfloat16)
    b3 = jax.random.uniform(k6, shape, dtype=jnp.float32).astype(jnp.bfloat16)
    loss3 = weighted_l1_loss(a3, b3)
    jax.block_until_ready(loss3)
    ref3 = _reference(a3, b3)
    assert jnp.allclose(loss3, ref3, rtol=1e-5, atol=1e-6), (loss3, ref3)

    print("KERNEL_OK")
</pallas_src>

<mosaic_0001>
module attributes {stable_mosaic.version = 11 : i64} {
  func.func @_wl1_kernel(%arg0: i32, %arg1: i32, %arg2: memref<16x128xf32, #tpu.memory_space<vmem>>, %arg3: memref<16x128xf32, #tpu.memory_space<vmem>>, %arg4: memref<8x128xf32, #tpu.memory_space<vmem>>, %arg5: memref<8x128xf32, #tpu.memory_space<vmem>>) attributes {dimension_semantics = [#tpu.dimension_semantics<parallel>, #tpu.dimension_semantics<arbitrary>], iteration_bounds = array<i64: 1, 1>, scalar_prefetch = 0 : i64, scratch_operands = 1 : i64, tpu.core_type = #tpu.core_type<tc>, window_params = [{transform_indices = @transform_0, window_bounds = array<i64: 16, 128>}, {transform_indices = @transform_1, window_bounds = array<i64: 16, 128>}, {transform_indices = @transform_2, window_bounds = array<i64: 8, 128>}]} {
    %c0_i32 = arith.constant 0 : i32
    %0 = arith.cmpi eq, %arg1, %c0_i32 : i32
    %1 = arith.extui %0 : i1 to i32
    %c0_i32_0 = arith.constant 0 : i32
    %2 = arith.cmpi ne, %1, %c0_i32_0 : i32
    scf.if %2 {
      %cst_10 = arith.constant 0.000000e+00 : f32
      %17 = vector.broadcast %cst_10 : f32 to vector<8x128xf32>
      %c0_11 = arith.constant 0 : index
      %c0_12 = arith.constant 0 : index
      %18 = vector.load %arg5[%c0_11, %c0_12] : memref<8x128xf32, #tpu.memory_space<vmem>>, vector<8x128xf32>
      tpu.vector_store %arg5[%c0_11, %c0_12], %17 {strides = array<i32>} : memref<8x128xf32, #tpu.memory_space<vmem>>, vector<8x128xf32>,
    } else {
    }
    %c0 = arith.constant 0 : index
    %c0_1 = arith.constant 0 : index
    %3 = vector.load %arg2[%c0, %c0_1] : memref<16x128xf32, #tpu.memory_space<vmem>>, vector<16x128xf32>
    %c0_2 = arith.constant 0 : index
    %c0_3 = arith.constant 0 : index
    %4 = vector.load %arg3[%c0_2, %c0_3] : memref<16x128xf32, #tpu.memory_space<vmem>>, vector<16x128xf32>
    %5 = arith.subf %3, %4 : vector<16x128xf32>
    %6 = math.absf %5 : vector<16x128xf32>
    %7 = arith.addf %3, %4 : vector<16x128xf32>
    %8 = arith.mulf %6, %7 : vector<16x128xf32>
    %c0_4 = arith.constant 0 : index
    %c0_5 = arith.constant 0 : index
    %9 = vector.load %arg5[%c0_4, %c0_5] : memref<8x128xf32, #tpu.memory_space<vmem>>, vector<8x128xf32>
    %10 = vector.shape_cast %8 : vector<16x128xf32> to vector<2x8x128xf32>
    %cst = arith.constant dense<0.000000e+00> : vector<8x128xf32>
    %11 = vector.multi_reduction <add>, %10, %cst [0] : vector<2x8x128xf32> to vector<8x128xf32>
    %12 = arith.addf %9, %11 : vector<8x128xf32>
    %c0_6 = arith.constant 0 : index
    %c0_7 = arith.constant 0 : index
    %13 = vector.load %arg5[%c0_6, %c0_7] : memref<8x128xf32, #tpu.memory_space<vmem>>, vector<8x128xf32>
    tpu.vector_store %arg5[%c0_6, %c0_7], %12 {strides = array<i32>} : memref<8x128xf32, #tpu.memory_space<vmem>>, vector<8x128xf32>,
    %c0_i32_8 = arith.constant 0 : i32
    %14 = arith.cmpi eq, %arg1, %c0_i32_8 : i32
    %15 = arith.extui %14 : i1 to i32
    %c0_i32_9 = arith.constant 0 : i32
    %16 = arith.cmpi ne, %15, %c0_i32_9 : i32
    scf.if %16 {
      %c0_10 = arith.constant 0 : index
      %c0_11 = arith.constant 0 : index
      %17 = vector.load %arg5[%c0_10, %c0_11] : memref<8x128xf32, #tpu.memory_space<vmem>>, vector<8x128xf32>
      %c0_12 = arith.constant 0 : index
      %c0_13 = arith.constant 0 : index
      %18 = vector.load %arg4[%c0_12, %c0_13] : memref<8x128xf32, #tpu.memory_space<vmem>>, vector<8x128xf32>
      tpu.vector_store %arg4[%c0_12, %c0_13], %17 {strides = array<i32>} : memref<8x128xf32, #tpu.memory_space<vmem>>, vector<8x128xf32>,
    } else {
    }
    return
  }
  func.func @transform_0(%arg0: i32, %arg1: i32) -> (i32, i32) {
    %c1_i32 = arith.constant 1 : i32
    %0 = arith.muli %arg0, %c1_i32 : i32
    %1 = arith.addi %0, %arg1 : i32
    %c0_i32 = arith.constant 0 : i32
    %2 = arith.minsi %1, %c0_i32 : i32
    %c0_i32_0 = arith.constant 0 : i32
    %c0_i32_1 = arith.constant 0 : i32
    return %2, %c0_i32_0 : i32, i32
  }
  func.func @transform_1(%arg0: i32, %arg1: i32) -> (i32, i32) {
    %c1_i32 = arith.constant 1 : i32
    %0 = arith.muli %arg0, %c1_i32 : i32
    %1 = arith.addi %0, %arg1 : i32
    %c0_i32 = arith.constant 0 : i32
    %2 = arith.minsi %1, %c0_i32 : i32
    %c0_i32_0 = arith.constant 0 : i32
    %c0_i32_1 = arith.constant 0 : i32
    return %2, %c0_i32_0 : i32, i32
  }
  func.func @transform_2(%arg0: i32, %arg1: i32) -> (i32, i32) {
    %c0_i32 = arith.constant 0 : i32
    %c0_i32_0 = arith.constant 0 : i32
    return %arg0, %c0_i32 : i32, i32
  }
}

</mosaic_0001>

<llo_original>
// kernel: tpu_custom_call.1
$region0: #{tpu_custom_call.1}
  #allocation0 [shape = 'u32[]', space=smem, size = 0x4, offset = 0x4, fixed_abs, tag = 'smem constant byte address 0x4 - core index']
  #allocation1 [shape = 'u32[144,128]{1,0:T(1,128)}', space=vmem, size = 0x12000, scoped, tag = 'internal scratch']
  #allocation2 [shape = 'f32[8,128]{1,0:T(8,128)}', space=vmem, size = 0x1000, scoped, tag = 'scratch operand']
  %s0 = inlined_call_operand.hbm [shape: f32[16,128], index: 0, kind: input, shape index: {}]
  %s1 = inlined_call_operand.hbm [shape: f32[16,128], index: 1, kind: input, shape index: {}]
  %s2 = inlined_call_operand.hbm [shape: f32[8,128], index: 2, kind: output, shape index: {}]
  %s3 = sld [smem:[#allocation0]]
  $region34: #{tpu_custom_call.1} parent=0
    _
  %s5 = ssub.s32 1, %s3
  %s6 = scalar_select 0, %s5, %s3
  $region1: #{tpu_custom_call.1} parent=0
    #allocation3 [shape = 'u8[8192]{0}', space=vmem, size = 0x2000, scoped, tag = 'input window, operand 0, single buffered']
    #allocation4 [shape = 's32[1]{0}', space=sflag, size = 0x4, scoped, tag = 'scoped memory for tpu_custom_call.1']
    #allocation5 [shape = 's32[1]{0}', space=sflag, size = 0x4, scoped, tag = 'scoped memory for tpu_custom_call.1']
    #allocation6 [shape = 'u8[8192]{0}', space=vmem, size = 0x2000, scoped, tag = 'input window, operand 1, single buffered']
    #allocation7 [shape = 's32[1]{0}', space=sflag, size = 0x4, scoped, tag = 'scoped memory for tpu_custom_call.1']
    #allocation8 [shape = 'u8[4096]{0}', space=vmem, size = 0x1000, scoped, tag = 'output window, operand 0, single buffered']
    %7 = vsyncpa [#allocation4], 0
    %8 = vsyncpa [#allocation7], 0
    %9 = vsyncpa [#allocation5], 0
    // Predicated region
    $region2: #{tpu_custom_call.1} parent=1 // pred_check
      _
    $region3: #{tpu_custom_call.1} parent=1 // pred_check_branch
      %11 = sbr.rel (0) target = $region5
    $region4: #{tpu_custom_call.1} parent=1 // pred_region
      %s12 = sadd.s32 0, 0
      %p13 = scmp.lt.s32.totalorder %s12, 0
      %s14 = scalar_select %p13, %s12, 0
      %s15 = smul.u32 2, %s14
      %s17 = ssub.s32 256, 256
      %18 = vsyncadd [#allocation4], %s17
      %s19 = smul.addr %s15, 128
      %s20 = scalar_lea.hbm %s0, %s19
      %s21 = sshll.u32 [#allocation3], 4
      %s22 = int_to_ptr.vmem [resolvable:$true] %s21
      %27 = dma.hbm_to_vmem [thread:$0]  %s20, 256, %s22, [#allocation4], 128, 128, 8
    $region5: #{tpu_custom_call.1} parent=1 // pred_fallthru
      _
    // Predicated region
    $region6: #{tpu_custom_call.1} parent=1 // pred_check
      _
    $region7: #{tpu_custom_call.1} parent=1 // pred_check_branch
      %29 = sbr.rel (0) target = $region9
    $region8: #{tpu_custom_call.1} parent=1 // pred_region
      %s30 = sadd.s32 0, 0
      %p31 = scmp.lt.s32.totalorder %s30, 0
      %s32 = scalar_select %p31, %s30, 0
      %s33 = smul.u32 2, %s32
      %s35 = ssub.s32 256, 256
      %36 = vsyncadd [#allocation7], %s35
      %s37 = smul.addr %s33, 128
      %s38 = scalar_lea.hbm %s1, %s37
      %s39 = sshll.u32 [#allocation6], 4
      %s40 = int_to_ptr.vmem [resolvable:$true] %s39
      %45 = dma.hbm_to_vmem [thread:$0]  %s38, 256, %s40, [#allocation7], 128, 128, 8
    $region9: #{tpu_custom_call.1} parent=1 // pred_fallthru
      _
    // Predicated region
    $region10: #{tpu_custom_call.1} parent=1 // pred_check
      _
    $region11: #{tpu_custom_call.1} parent=1 // pred_check_branch
      %47 = sbr.rel (0) target = $region13
    $region12: #{tpu_custom_call.1} parent=1 // pred_region
      %48 = dma.done [#allocation4], 256
    $region13: #{tpu_custom_call.1} parent=1 // pred_fallthru
      _
    // Predicated region
    $region14: #{tpu_custom_call.1} parent=1 // pred_check
      _
    $region15: #{tpu_custom_call.1} parent=1 // pred_check_branch
      %50 = sbr.rel (0) target = $region17
    $region16: #{tpu_custom_call.1} parent=1 // pred_region
      %51 = dma.done [#allocation7], 256
    $region17: #{tpu_custom_call.1} parent=1 // pred_fallthru
      _
    %s52 = sadd.s32 0, 0
    %p53 = scmp.lt.s32.totalorder %s52, 0
    %s54 = scalar_select %p53, %s52, 0
    %s55 = smul.u32 2, %s54
    %s56 = sadd.s32 0, 0
    %p57 = scmp.lt.s32.totalorder %s56, 0
    %s58 = scalar_select %p57, %s56, 0
    %s59 = smul.u32 2, %s58
    %p60 = scmp.eq.s32.totalorder 0, 0
    // Predicated region
    $region18: #{tpu_custom_call.1} parent=1 // pred_check
      %p61 = pneg %p60
    $region19: #{tpu_custom_call.1} parent=1 // pred_check_branch
      %63 = sbr.rel (%p61) target = $region21
    $region20: #{tpu_custom_call.1} parent=1 // pred_region
      %64 = vst [vmem:[#allocation2] sm:$0xff] 0.0
    $region21: #{tpu_custom_call.1} parent=1 // pred_fallthru
      _
    %v65 = vld [vmem:[#allocation3] sm:$0xff]
    %v66 = vld [vmem:[#allocation3 + $0x8] sm:$0xff]
    %v67 = vld [vmem:[#allocation6] sm:$0xff]
    %v68 = vld [vmem:[#allocation6 + $0x8] sm:$0xff]
    %v69 = vsub.f32 %v65, %v67
    %v70 = vsub.f32 %v66, %v68
    %v71 = vand.u32 2147483647, %v69
    %v72 = vand.u32 2147483647, %v70
    %v73 = vadd.f32 %v65, %v67
    %v74 = vadd.f32 %v66, %v68
    %v75 = vmul.f32 %v71, %v73
    %v76 = vmul.f32 %v72, %v74
    %v77 = vld [vmem:[#allocation2] sm:$0xff]
    %v78 = vadd.f32 %v75, %v76
    %v79 = vadd.f32 %v77, %v78
    %80 = vst [vmem:[#allocation2] sm:$0xff] %v79
    // Predicated region
    $region22: #{tpu_custom_call.1} parent=1 // pred_check
      %p81 = pneg %p60
    $region23: #{tpu_custom_call.1} parent=1 // pred_check_branch
      %83 = sbr.rel (%p81) target = $region25
    $region24: #{tpu_custom_call.1} parent=1 // pred_region
      %v84 = vld [vmem:[#allocation2] sm:$0xff]
      %85 = vst [vmem:[#allocation8] sm:$0xff] %v84
    $region25: #{tpu_custom_call.1} parent=1 // pred_fallthru
      _
    // Predicated region
    $region26: #{tpu_custom_call.1} parent=1 // pred_check
      _
    $region27: #{tpu_custom_call.1} parent=1 // pred_check_branch
      %87 = sbr.rel (0) target = $region29
    $region28: #{tpu_custom_call.1} parent=1 // pred_region
      %s89 = ssub.s32 128, 128
      %90 = vsyncadd [#allocation5], %s89
      %s92 = sshll.u32 [#allocation8], 4
      %s93 = int_to_ptr.vmem [resolvable:$true] %s92
      %95 = dma.vmem_to_hbm [thread:$0]  %s93, 128, %s2, [#allocation5]
    $region29: #{tpu_custom_call.1} parent=1 // pred_fallthru
      _
    // Predicated region
    $region30: #{tpu_custom_call.1} parent=1 // pred_check
      _
    $region31: #{tpu_custom_call.1} parent=1 // pred_check_branch
      %97 = sbr.rel (0) target = $region33
    $region32: #{tpu_custom_call.1} parent=1 // pred_region
      %98 = dma.done [#allocation5], 128
    $region33: #{tpu_custom_call.1} parent=1 // pred_fallthru
      _
    %99 = vsyncpa [#allocation4], 1
    %100 = vsyncpa [#allocation7], 1
    %101 = vsyncpa [#allocation5], 1

</llo_original>
